<compile_context>
chip_gen: v7x
topology: tpu7x:2x2x1
jax: 0.10.0
libtpu: 0.0.40
codegen_flags: <defaults>
</compile_context>

<pallas_src>
import jax
import jax.numpy as jnp
from jax import lax
from jax.experimental import pallas as pl
from jax.experimental.pallas import tpu as pltpu


_LANE = 128
_SUBLANE = 8


def _physical_vmem_bytes():
    """Generation-aware physical VMEM (v5e/v6e: 128 MiB, v7x: 64 MiB)."""
    phys = 64 * 1024 * 1024  # conservative fallback (v7x size)
    try:
        info = pltpu.get_tpu_info()
        phys = int(getattr(info, "vmem_capacity_bytes", phys))
    except Exception:
        pass
    return phys


def _tile_vmem_bytes(tb, tn, h_in, x_item, w_item, o_item, b_item):
    """Pallas double-buffers every BlockSpec operand (even constant index maps)."""
    return (2 * tb * h_in * x_item        # x tiles
            + 2 * h_in * tn * w_item      # weight tiles (dominant stream)
            + 2 * tb * tn * o_item        # output tiles
            + 2 * 1 * tn * b_item)        # bias tiles (tiny)


def _pick_tiles(batch, h_in, h_out, x_item, w_item, o_item, b_item, budget):
    # Batch tile: full batch when small, else 256 rows (multiple of 8).
    tb = batch if batch <= 256 else 256

    # N tile: lane-dense (multiple of 128) divisor of H_out, capped at
    # H_out // 2 so grid_n >= 2 (megacore sharding + pipelining).
    if h_out % _LANE != 0 or h_out < 2 * _LANE:
        cands = [h_out]
    else:
        cands = [c for c in (2048, 1024, 512, 256, 128)
                 if c <= h_out // 2 and h_out % c == 0] or [_LANE]

    for tn in cands:
        if _tile_vmem_bytes(tb, tn, h_in, x_item, w_item, o_item, b_item) <= budget:
            return tb, tn

    # Even the smallest N tile does not fit: shrink the batch tile as well.
    tn = cands[-1]
    while (tb > _SUBLANE
           and _tile_vmem_bytes(tb, tn, h_in, x_item, w_item, o_item, b_item) > budget):
        tb = max(_SUBLANE, (tb // 2) // _SUBLANE * _SUBLANE)
    return tb, tn


def _make_pooler_kernel(precision):
    def kernel(x_ref, w_ref, b_ref, o_ref):
        # x_ref: (tb, H_in)   w_ref: (H_in, tn)  [pre-transposed, K-major]
        # b_ref: (1, tn)      o_ref: (tb, tn)
        x = x_ref[...]
        w = w_ref[...]
        if x.dtype != w.dtype:
            # bf16 weight stream: feed the MXU bf16 x bf16, accumulate in f32.
            x = x.astype(w.dtype)
        acc = lax.dot_general(
            x, w,
            dimension_numbers=(((1,), (0,)), ((), ())),   # x[.,K] · w_t[K,N]
            preferred_element_type=jnp.float32,
            precision=precision,
        )
        acc = acc + b_ref[...].astype(jnp.float32)
        o_ref[...] = jnp.tanh(acc).astype(o_ref.dtype)
    return kernel


def prepare_pooler_params(weight, bias, stream_dtype=jnp.bfloat16):
    """One-time parameter prep (do at load time, not per forward call).

    weight: PyTorch nn.Linear layout [H_out, H_in]; bias: [H_out].
    Returns (w_t, bias2d): weight transposed to [H_in, H_out] (MXU-native,
    no per-tile transpose in the kernel) and cast to `stream_dtype`
    (bf16 by default → halves the dominant HBM weight stream).
    """
    w_t = jnp.asarray(weight).T.astype(stream_dtype)
    b2d = jnp.asarray(bias).reshape(1, -1)
    return w_t, b2d


def pooler_forward(x, w_t, bias2d, *, tile_n=None, tile_b=None, precision=None,
                   out_dtype=None):
    """x: [B, H_in]; w_t: [H_in, H_out] (from prepare_pooler_params); bias2d: [1, H_out]."""
    B, H_in = x.shape
    kw, H_out = w_t.shape
    assert kw == H_in, "weight must be pre-transposed to [H_in, H_out]"
    assert bias2d.shape == (1, H_out)

    out_dtype = out_dtype or x.dtype
    x_item = jnp.dtype(x.dtype).itemsize
    w_item = jnp.dtype(w_t.dtype).itemsize
    o_item = jnp.dtype(out_dtype).itemsize
    b_item = jnp.dtype(bias2d.dtype).itemsize

    phys_vmem = _physical_vmem_bytes()
    vmem_limit = int(min((phys_vmem * 3) // 4, 100 * 1024 * 1024))
    budget = vmem_limit - 4 * 1024 * 1024

    auto_tb, auto_tn = _pick_tiles(B, H_in, H_out,
                                   x_item, w_item, o_item, b_item, budget)
    tn = tile_n if tile_n is not None else auto_tn
    tb = tile_b if tile_b is not None else auto_tb
    assert H_out % tn == 0, "tile_n must divide H_out"
    assert tb == B or tb % _SUBLANE == 0, "tile_b must equal B or be a multiple of 8"

    grid_b = pl.cdiv(B, tb)
    grid_n = H_out // tn

    cost = pl.CostEstimate(
        flops=2 * B * H_in * H_out,
        transcendentals=B * H_out,
        bytes_accessed=(grid_b * H_in * H_out * w_item    # weight re-streamed per B tile
                        + B * H_in * x_item
                        + B * H_out * o_item
                        + grid_b * H_out * b_item),
    )

    return pl.pallas_call(
        _make_pooler_kernel(precision),
        out_shape=jax.ShapeDtypeStruct((B, H_out), out_dtype),
        grid=(grid_b, grid_n),
        in_specs=[
            pl.BlockSpec((tb, H_in), lambda i, j: (i, 0)),   # x: reused across j
            pl.BlockSpec((H_in, tn), lambda i, j: (0, j)),   # weight: streamed over N
            pl.BlockSpec((1, tn), lambda i, j: (0, j)),      # bias slice (tiny DMA)
        ],
        out_specs=pl.BlockSpec((tb, tn), lambda i, j: (i, j)),
        compiler_params=pltpu.CompilerParams(
            dimension_semantics=("parallel", "parallel"),    # shards across v7x's 2 TCs
            vmem_limit_bytes=vmem_limit,
        ),
        cost_estimate=cost,
    )(x, w_t, bias2d)


if __name__ == "__main__":
    # Small but lane-dense shapes (hidden multiple of 128 → unmasked stores).
    batch, hidden = 16, 256

    key = jax.random.PRNGKey(0)
    k_x, k_w, k_b = jax.random.split(key, 3)

    # Deterministic synthetic parameters in PyTorch nn.Linear layout.
    x = jax.random.normal(k_x, (batch, hidden), dtype=jnp.float32)
    weight = jax.random.normal(k_w, (hidden, hidden), dtype=jnp.float32) * 0.05
    bias = jax.random.normal(k_b, (hidden,), dtype=jnp.float32) * 0.01

    # f32 reference (same math as torch Linear + Tanh).
    ref = jnp.tanh(jnp.dot(x, weight.T, precision=lax.Precision.HIGHEST) + bias)

    # 1) Exactness path: f32 weight stream + HIGHEST precision.
    w_t32, b2d = prepare_pooler_params(weight, bias, stream_dtype=jnp.float32)
    out_exact = jax.block_until_ready(
        pooler_forward(x, w_t32, b2d, precision=lax.Precision.HIGHEST))
    assert out_exact.shape == (batch, hidden)
    assert jnp.allclose(out_exact, ref, atol=1e-5, rtol=1e-5)

    # 2) Performance path: bf16 weight stream, default MXU precision, auto tiles
    #    (tn=128 → grid_n=2, so the N axis actually shards/pipelines).
    w_t16, _ = prepare_pooler_params(weight, bias, stream_dtype=jnp.bfloat16)
    out_fast = jax.block_until_ready(pooler_forward(x, w_t16, b2d))
    assert jnp.allclose(out_fast, ref, atol=2e-2, rtol=2e-2)

    # 3) Batch-tiled path (exercises the 2-D grid used for training-size B).
    out_tiled = jax.block_until_ready(
        pooler_forward(x, w_t16, b2d, tile_b=8, tile_n=128))
    assert jnp.allclose(out_tiled, ref, atol=2e-2, rtol=2e-2)

    print("KERNEL_OK")
</pallas_src>

<mosaic_0001>
module attributes {stable_mosaic.version = 11 : i64} {
  func.func @kernel(%arg0: i32, %arg1: i32, %arg2: memref<16x256xf32, #tpu.memory_space<vmem>>, %arg3: memref<256x128xf32, #tpu.memory_space<vmem>>, %arg4: memref<1x128xf32, #tpu.memory_space<vmem>>, %arg5: memref<16x128xf32, #tpu.memory_space<vmem>>) attributes {dimension_semantics = [#tpu.dimension_semantics<parallel>, #tpu.dimension_semantics<parallel>], iteration_bounds = array<i64: 1, 2>, scalar_prefetch = 0 : i64, scratch_operands = 0 : i64, tpu.core_type = #tpu.core_type<tc>, window_params = [{transform_indices = @transform_0, window_bounds = array<i64: 16, 256>}, {transform_indices = @transform_1, window_bounds = array<i64: 256, 128>}, {transform_indices = @transform_2, window_bounds = array<i64: 1, 128>}, {transform_indices = @transform_3, window_bounds = array<i64: 16, 128>}]} {
    %c0 = arith.constant 0 : index
    %c0_0 = arith.constant 0 : index
    %0 = vector.load %arg2[%c0, %c0_0] : memref<16x256xf32, #tpu.memory_space<vmem>>, vector<16x256xf32>
    %c0_1 = arith.constant 0 : index
    %c0_2 = arith.constant 0 : index
    %1 = vector.load %arg3[%c0_1, %c0_2] : memref<256x128xf32, #tpu.memory_space<vmem>>, vector<256x128xf32>
    %cst = arith.constant dense<0.000000e+00> : vector<16x128xf32>
    %2 = tpu.matmul %0, %1, %cst {dimension_numbers = #tpu.dot_dimension_numbers<[1], [0], [0], [1], [0, 0, 1, 1], [], []>, precision = #tpu.contract_precision<fp32>} : vector<16x256xf32>, vector<256x128xf32>, vector<16x128xf32> -> vector<16x128xf32>
    %c0_3 = arith.constant 0 : index
    %c0_4 = arith.constant 0 : index
    %3 = vector.load %arg4[%c0_3, %c0_4] : memref<1x128xf32, #tpu.memory_space<vmem>>, vector<1x128xf32>
    %4 = vector.broadcast %3 : vector<1x128xf32> to vector<16x128xf32>
    %5 = arith.addf %2, %4 : vector<16x128xf32>
    %6 = math.tanh %5 : vector<16x128xf32>
    %c0_5 = arith.constant 0 : index
    %c0_6 = arith.constant 0 : index
    %7 = vector.load %arg5[%c0_5, %c0_6] : memref<16x128xf32, #tpu.memory_space<vmem>>, vector<16x128xf32>
    tpu.vector_store %arg5[%c0_5, %c0_6], %6 {strides = array<i32>} : memref<16x128xf32, #tpu.memory_space<vmem>>, vector<16x128xf32>,
    return
  }
  func.func @transform_0(%arg0: i32, %arg1: i32) -> (i32, i32) {
    %c0_i32 = arith.constant 0 : i32
    %c0_i32_0 = arith.constant 0 : i32
    return %arg0, %c0_i32 : i32, i32
  }
  func.func @transform_1(%arg0: i32, %arg1: i32) -> (i32, i32) {
    %c0_i32 = arith.constant 0 : i32
    %c0_i32_0 = arith.constant 0 : i32
    return %c0_i32, %arg1 : i32, i32
  }
  func.func @transform_2(%arg0: i32, %arg1: i32) -> (i32, i32) {
    %c0_i32 = arith.constant 0 : i32
    %c0_i32_0 = arith.constant 0 : i32
    return %c0_i32, %arg1 : i32, i32
  }
  func.func @transform_3(%arg0: i32, %arg1: i32) -> (i32, i32) {
    %c0_i32 = arith.constant 0 : i32
    return %arg0, %arg1 : i32, i32
  }
}

</mosaic_0001>

<llo_original>
// kernel: tpu_custom_call.1
$region0: #{tpu_custom_call.1}
  #allocation0 [shape = 'u32[]', space=smem, size = 0x4, offset = 0x4, fixed_abs, tag = 'smem constant byte address 0x4 - core index']
  #allocation1 [shape = 'u32[144,128]{1,0:T(1,128)}', space=vmem, size = 0x12000, scoped, tag = 'internal scratch']
  %s0 = inlined_call_operand.hbm [shape: f32[16,256], index: 0, kind: input, shape index: {}]
  %s1 = inlined_call_operand.hbm [shape: f32[256,256], index: 1, kind: input, shape index: {}]
  %s2 = inlined_call_operand.vmem [shape: f32[1,256], index: 2, kind: input, shape index: {}]
  %s3 = inlined_call_operand.hbm [shape: f32[16,256], index: 3, kind: output, shape index: {}]
  %s4 = sld [smem:[#allocation0]]
  $region53: #{tpu_custom_call.1} parent=0
    _
  %s6 = ssub.s32 1, %s4
  %s7 = scalar_select 0, %s6, %s4
  $region1: #{tpu_custom_call.1} parent=0
    #allocation2 [shape = 'u8[16384]{0}', space=vmem, size = 0x4000, scoped, tag = 'input window, operand 0, single buffered']
    #allocation3 [shape = 's32[2]{0}', space=sflag, size = 0x8, scoped, tag = 'scoped memory for tpu_custom_call.1']
    #allocation4 [shape = 's32[2]{0}', space=sflag, size = 0x8, scoped, tag = 'scoped memory for tpu_custom_call.1']
    #allocation5 [shape = 'u8[262144]{0}', space=vmem, size = 0x40000, scoped, tag = 'input window, operand 1']
    #allocation6 [shape = 's32[2]{0}', space=sflag, size = 0x8, scoped, tag = 'scoped memory for tpu_custom_call.1']
    #allocation7 [shape = 'u8[16384]{0}', space=vmem, size = 0x4000, scoped, tag = 'output window, operand 0']
    %8 = vsyncpa [#allocation3], 0
    %9 = vsyncpa [#allocation6], 0
    %s10 = scalar_lea.sflag [#allocation6], 1
    %11 = vsyncpa %s10, 0
    %12 = vsyncpa [#allocation4], 0
    %s13 = scalar_lea.sflag [#allocation4], 1
    %14 = vsyncpa %s13, 0
    loop: start=0, step=1, limit=4
    $region2: #{tpu_custom_call.1} parent=1 // loop_pre_header
      _
    $region3: #{tpu_custom_call.1} parent=1 // loop_header
      %s16 = sphi 0, %s20
      %p17 = scmp.ge.s32.totalorder %s16, 4
      %s23 = sphi 0, %s35
      %s24 = sphi 0, %s31
      %s25 = sphi 0, %s23
      %s26 = sphi 0, %s24
      %s27 = sphi 0, %s25
      %s28 = sphi 0, %s26
      %s38 = sphi 0, %s40
      %s41 = sphi 0, %s38
      %s42 = sphi 0, %s41
      %s58 = sphi 0, %s42
      %s64 = sphi 0, %s66
      %s67 = sphi 0, %s64
      %s68 = sphi 0, %s67
      %s84 = sphi 0, %s68
      %s90 = sphi 0, %s92
      %s93 = sphi 0, %s90
      %s94 = sphi 0, %s93
      %s110 = sphi 0, %s94
      %s118 = sphi 0, %s120
      %s121 = sphi 0, %s118
      %s122 = sphi 0, %s121
      %s138 = sphi 0, %s122
    $region4: #{tpu_custom_call.1} parent=1 // loop_header_branch
      %19 = sbr.rel (%p17) target = $region8
    $region5: #{tpu_custom_call.1} parent=1 // loop_body
      %s21 = ssub.s32 %s16, 1
      %s22 = ssub.s32 %s16, 2
      %s29 = sadd.s32 1, %s24
      %p30 = scmp.ge.s32.totalorder %s29, 2
      %s31 = scalar_select %p30, 0, %s29
      %s32 = sadd.s32 1, %s23
      %s33 = scalar_select %p30, %s32, %s23
      %p34 = scmp.ge.s32.totalorder %s33, 1
      %s35 = scalar_select %p34, 0, %s33
      %s36 = ssub.s32 %s23, %s35
      %p37 = scmp.eq.s32.totalorder %s36, 0
      %s39 = sadd.s32 %s38, 1
      %s40 = scalar_select %p37, %s38, %s39
      %p43 = pneg %p37
      %p44 = scmp.eq.s32.totalorder %s16, 1
      %p45 = por %p43, %p44
      %p46 = scmp.ne.s32.totalorder %s38, %s41
      %p47 = scmp.eq.s32.totalorder %s16, 0
      %p48 = por %p46, %p47
      %p49 = scmp.ne.s32.totalorder %s38, %s41
      %p50 = scmp.eq.s32.totalorder %s21, 1
      %p51 = por %p49, %p50
      %p52 = scmp.ne.s32.totalorder %s41, %s42
      %p53 = scmp.eq.s32.totalorder %s21, 0
      %p54 = por %p52, %p53
      %p55 = scmp.ne.s32.totalorder %s41, %s42
      %p56 = scmp.eq.s32.totalorder %s22, 1
      %p57 = por %p55, %p56
      %p59 = scmp.ne.s32.totalorder %s42, %s58
      %p60 = scmp.eq.s32.totalorder %s22, 0
      %p61 = por %p59, %p60
      %s62 = ssub.s32 %s24, %s31
      %p63 = scmp.eq.s32.totalorder %s62, 0
      %s65 = sadd.s32 %s64, 1
      %s66 = scalar_select %p63, %s64, %s65
      %p69 = pneg %p63
      %p70 = scmp.eq.s32.totalorder %s16, 1
      %p71 = por %p69, %p70
      %p72 = scmp.ne.s32.totalorder %s64, %s67
      %p73 = scmp.eq.s32.totalorder %s16, 0
      %p74 = por %p72, %p73
      %p75 = scmp.ne.s32.totalorder %s64, %s67
      %p76 = scmp.eq.s32.totalorder %s21, 1
      %p77 = por %p75, %p76
      %p78 = scmp.ne.s32.totalorder %s67, %s68
      %p79 = scmp.eq.s32.totalorder %s21, 0
      %p80 = por %p78, %p79
      %p81 = scmp.ne.s32.totalorder %s67, %s68
      %p82 = scmp.eq.s32.totalorder %s22, 1
      %p83 = por %p81, %p82
      %p85 = scmp.ne.s32.totalorder %s68, %s84
      %p86 = scmp.eq.s32.totalorder %s22, 0
      %p87 = por %p85, %p86
      %s88 = ssub.s32 %s24, %s31
      %p89 = scmp.eq.s32.totalorder %s88, 0
      %s91 = sadd.s32 %s90, 1
      %s92 = scalar_select %p89, %s90, %s91
      %p95 = pneg %p89
      %p96 = scmp.eq.s32.totalorder %s16, 1
      %p97 = por %p95, %p96
      %p98 = scmp.ne.s32.totalorder %s90, %s93
      %p99 = scmp.eq.s32.totalorder %s16, 0
      %p100 = por %p98, %p99
      %p101 = scmp.ne.s32.totalorder %s90, %s93
      %p102 = scmp.eq.s32.totalorder %s21, 1
      %p103 = por %p101, %p102
      %p104 = scmp.ne.s32.totalorder %s93, %s94
      %p105 = scmp.eq.s32.totalorder %s21, 0
      %p106 = por %p104, %p105
      %p107 = scmp.ne.s32.totalorder %s93, %s94
      %p108 = scmp.eq.s32.totalorder %s22, 1
      %p109 = por %p107, %p108
      %p111 = scmp.ne.s32.totalorder %s94, %s110
      %p112 = scmp.eq.s32.totalorder %s22, 0
      %p113 = por %p111, %p112
      %s114 = ssub.s32 %s23, %s35
      %s115 = ssub.s32 %s24, %s31
      %s116 = sor.u32 %s114, %s115
      %p117 = scmp.eq.s32.totalorder %s116, 0
      %s119 = sadd.s32 %s118, 1
      %s120 = scalar_select %p117, %s118, %s119
      %p123 = pneg %p117
      %p124 = scmp.eq.s32.totalorder %s16, 1
      %p125 = por %p123, %p124
      %p126 = scmp.ne.s32.totalorder %s118, %s121
      %p127 = scmp.eq.s32.totalorder %s16, 0
      %p128 = por %p126, %p127
      %p129 = scmp.ne.s32.totalorder %s118, %s121
      %p130 = scmp.eq.s32.totalorder %s21, 1
      %p131 = por %p129, %p130
      %p132 = scmp.ne.s32.totalorder %s121, %s122
      %p133 = scmp.eq.s32.totalorder %s21, 0
      %p134 = por %p132, %p133
      %p135 = scmp.ne.s32.totalorder %s121, %s122
      %p136 = scmp.eq.s32.totalorder %s22, 1
      %p137 = por %p135, %p136
      %p139 = scmp.ne.s32.totalorder %s122, %s138
      %p140 = scmp.eq.s32.totalorder %s22, 0
      %p141 = por %p139, %p140
      %p142 = scmp.le.s32.totalorder 1, %s16
      %p143 = scmp.lt.s32.totalorder %s16, 3
      %p144 = pnand %p142, %p143
      %p145 = pneg %p144
      // Predicated region
      $region9: #{tpu_custom_call.1} parent=5 // pred_check
        _
      $region10: #{tpu_custom_call.1} parent=5 // pred_check_branch
        %147 = sbr.rel (%p144) target = $region12
      $region11: #{tpu_custom_call.1} parent=5 // pred_region
        %s148 = ssub.s32 %s16, 1
        // Predicated region
        $region13: #{tpu_custom_call.1} parent=11 // pred_check
          %p149 = pneg %p54
        $region14: #{tpu_custom_call.1} parent=11 // pred_check_branch
          %151 = sbr.rel (%p149) target = $region16
        $region15: #{tpu_custom_call.1} parent=11 // pred_region
          %s152 = smul.u32 2, %s25
          %s154 = ssub.s32 512, 512
          %155 = vsyncadd [#allocation3], %s154
          %s156 = smul.addr %s152, 2
          %s157 = smul.addr %s156, 128
          %s158 = scalar_lea.hbm %s0, %s157
          %s159 = sshll.u32 [#allocation2], 4
          %s160 = int_to_ptr.vmem [resolvable:$true] %s159
          %165 = dma.hbm_to_vmem [thread:$0]  %s158, 512, %s160, [#allocation3], 256, 256, 16
        $region16: #{tpu_custom_call.1} parent=11 // pred_fallthru
          _
      $region12: #{tpu_custom_call.1} parent=5 // pred_fallthru
        _
      %p166 = scmp.lt.s32.totalorder %s16, 2
      // Predicated region
      $region17: #{tpu_custom_call.1} parent=5 // pred_check
        %p167 = pneg %p166
      $region18: #{tpu_custom_call.1} parent=5 // pred_check_branch
        %169 = sbr.rel (%p167) target = $region20
      $region19: #{tpu_custom_call.1} parent=5 // pred_region
        // Predicated region
        $region21: #{tpu_custom_call.1} parent=19 // pred_check
          %p170 = pneg %p74
        $region22: #{tpu_custom_call.1} parent=19 // pred_check_branch
          %172 = sbr.rel (%p170) target = $region24
        $region23: #{tpu_custom_call.1} parent=19 // pred_region
          %s173 = sand.u32 %s64, 1
          %s174 = scalar_lea.sflag [#allocation6], %s173
          %s175 = sand.u32 %s64, 1
          %s176 = smul.addr %s175, 256
          %s177 = scalar_lea.vmem [#allocation5], %s176
          %s179 = ssub.s32 4096, 4096
          %180 = vsyncadd %s174, %s179
          %s181 = smul.addr %s24, 128
          %s182 = scalar_lea.hbm %s1, %s181
          %s183 = sshll.u32 %s177, 4
          %s184 = int_to_ptr.vmem [resolvable:$true] %s183
          %189 = dma.hbm_to_vmem [thread:$0]  %s182, 4096, %s184, %s174, 256, 128, 8
        $region24: #{tpu_custom_call.1} parent=19 // pred_fallthru
          _
        // Predicated region
        $region25: #{tpu_custom_call.1} parent=19 // pred_check
          %p190 = pneg %p100
        $region26: #{tpu_custom_call.1} parent=19 // pred_check_branch
          %192 = sbr.rel (%p190) target = $region28
        $region27: #{tpu_custom_call.1} parent=19 // pred_region
          %p193 = scmp.lt.s32.totalorder %s24, 1
          %s194 = scalar_select %p193, %s24, 1
          %s195 = scalar_lea.vmem %s2, %s194
        $region28: #{tpu_custom_call.1} parent=19 // pred_fallthru
          _
      $region20: #{tpu_custom_call.1} parent=5 // pred_fallthru
        _
      %p196 = scmp.le.s32.totalorder 1, %s16
      %p197 = scmp.lt.s32.totalorder %s16, 3
      %p198 = pnand %p196, %p197
      %p199 = pneg %p198
      // Predicated region
      $region29: #{tpu_custom_call.1} parent=5 // pred_check
        _
      $region30: #{tpu_custom_call.1} parent=5 // pred_check_branch
        %201 = sbr.rel (%p198) target = $region32
      $region31: #{tpu_custom_call.1} parent=5 // pred_region
        %s202 = ssub.s32 %s16, 1
        // Predicated region
        $region33: #{tpu_custom_call.1} parent=31 // pred_check
          %p203 = pneg %p54
        $region34: #{tpu_custom_call.1} parent=31 // pred_check_branch
          %205 = sbr.rel (%p203) target = $region36
        $region35: #{tpu_custom_call.1} parent=31 // pred_region
          %206 = dma.done [#allocation3], 512
        $region36: #{tpu_custom_call.1} parent=31 // pred_fallthru
          _
        %s207 = sand.u32 %s67, 1
        %s208 = scalar_lea.sflag [#allocation6], %s207
        %s209 = sand.u32 %s67, 1
        %s210 = smul.addr %s209, 256
        %s211 = scalar_lea.vmem [#allocation5], %s210
        // Predicated region
        $region37: #{tpu_custom_call.1} parent=31 // pred_check
          %p212 = pneg %p80
        $region38: #{tpu_custom_call.1} parent=31 // pred_check_branch
          %214 = sbr.rel (%p212) target = $region40
        $region39: #{tpu_custom_call.1} parent=31 // pred_region
          %215 = dma.done %s208, 4096
        $region40: #{tpu_custom_call.1} parent=31 // pred_fallthru
          _
        %p216 = pneg %p54
        %p217 = pneg %p51
        %s218 = sand.u32 %s67, 1
        %s219 = scalar_lea.sflag [#allocation6], %s218
        %s220 = sand.u32 %s67, 1
        %s221 = smul.addr %s220, 256
        %s222 = scalar_lea.vmem [#allocation5], %s221
        %p223 = pneg %p80
        %p224 = pneg %p77
        %p225 = scmp.lt.s32.totalorder %s26, 1
        %s226 = scalar_select %p225, %s26, 1
        %s227 = scalar_lea.vmem %s2, %s226
        %p228 = pneg %p106
        %p229 = pneg %p103
        %p230 = pneg %p134
        %p231 = pneg %p131
        %s232 = sand.u32 %s121, 1
        %s233 = scalar_lea.sflag [#allocation4], %s232
        %s234 = sand.u32 %s121, 1
        %s235 = smul.addr %s234, 16
        %s236 = scalar_lea.vmem [#allocation7], %s235
        %s237 = smul.u32 2, %s25
        %p238 = scmp.lt.s32.totalorder %s26, 1
        %s239 = scalar_select %p238, %s26, 1
        %s240 = scalar_lea.vmem %s2, %s239
        %s241 = smul.u32 2, %s25
        %v242 = vld [vmem:[#allocation2] sm:$0xff]
        %v243 = vld [vmem:[#allocation2 + $0x8] sm:$0xff]
        %v244 = vld [vmem:[#allocation2 + $0x10] sm:$0xff]
        %v245 = vld [vmem:[#allocation2 + $0x18] sm:$0xff]
        %v246 = vld [vmem:[%s211] sm:$0xff]
        %v247 = vld [vmem:[%s211 + $0x8] sm:$0xff]
        %v248 = vld [vmem:[%s211 + $0x10] sm:$0xff]
        %v249 = vld [vmem:[%s211 + $0x18] sm:$0xff]
        %v250 = vld [vmem:[%s211 + $0x20] sm:$0xff]
        %v251 = vld [vmem:[%s211 + $0x28] sm:$0xff]
        %v252 = vld [vmem:[%s211 + $0x30] sm:$0xff]
        %v253 = vld [vmem:[%s211 + $0x38] sm:$0xff]
        %v254 = vld [vmem:[%s211 + $0x40] sm:$0xff]
        %v255 = vld [vmem:[%s211 + $0x48] sm:$0xff]
        %v256 = vld [vmem:[%s211 + $0x50] sm:$0xff]
        %v257 = vld [vmem:[%s211 + $0x58] sm:$0xff]
        %v258 = vld [vmem:[%s211 + $0x60] sm:$0xff]
        %v259 = vld [vmem:[%s211 + $0x68] sm:$0xff]
        %v260 = vld [vmem:[%s211 + $0x70] sm:$0xff]
        %v261 = vld [vmem:[%s211 + $0x78] sm:$0xff]
        %v262 = vld [vmem:[%s211 + $0x80] sm:$0xff]
        %v263 = vld [vmem:[%s211 + $0x88] sm:$0xff]
        %v264 = vld [vmem:[%s211 + $0x90] sm:$0xff]
        %v265 = vld [vmem:[%s211 + $0x98] sm:$0xff]
        %v266 = vld [vmem:[%s211 + $0xa0] sm:$0xff]
        %v267 = vld [vmem:[%s211 + $0xa8] sm:$0xff]
        %v268 = vld [vmem:[%s211 + $0xb0] sm:$0xff]
        %v269 = vld [vmem:[%s211 + $0xb8] sm:$0xff]
        %v270 = vld [vmem:[%s211 + $0xc0] sm:$0xff]
        %v271 = vld [vmem:[%s211 + $0xc8] sm:$0xff]
        %v272 = vld [vmem:[%s211 + $0xd0] sm:$0xff]
        %v273 = vld [vmem:[%s211 + $0xd8] sm:$0xff]
        %v274 = vld [vmem:[%s211 + $0xe0] sm:$0xff]
        %v275 = vld [vmem:[%s211 + $0xe8] sm:$0xff]
        %v276 = vld [vmem:[%s211 + $0xf0] sm:$0xff]
        %v277 = vld [vmem:[%s211 + $0xf8] sm:$0xff]
        %v278 = vld [vmem:[%s240] sm:$0x1]
        %v280 = vlaneseq
        %v281 = vshrl.u32 %v280, 7
        %v282 = vsub.s32 0, %v281
        %v283 = vrot.slane %v278, %v282
        %285 = vmatprep.subr.mxu0 0.0
        %v286 = vand.u32 %v246, 4294901760
        %287 = vmatpush1.msra.mxu0 %v286
        %288 = vmatprep.subr.mxu0 0.0
        %v289 = vand.u32 %v247, 4294901760
        %290 = vmatpush1.msra.mxu0 %v289
        %291 = vmatprep.subr.mxu0 0.0
        %v292 = vand.u32 %v248, 4294901760
        %293 = vmatpush1.msra.mxu0 %v292
        %294 = vmatprep.subr.mxu0 0.0
        %v295 = vand.u32 %v249, 4294901760
        %296 = vmatpush1.msra.mxu0 %v295
        %297 = vmatprep.subr.mxu0 0.0
        %v298 = vand.u32 %v250, 4294901760
        %299 = vmatpush1.msra.mxu0 %v298
        %300 = vmatprep.subr.mxu0 0.0
        %v301 = vand.u32 %v251, 4294901760
        %302 = vmatpush1.msra.mxu0 %v301
        %303 = vmatprep.subr.mxu0 0.0
        %v304 = vand.u32 %v252, 4294901760
        %305 = vmatpush1.msra.mxu0 %v304
        %306 = vmatprep.subr.mxu0 0.0
        %v307 = vand.u32 %v253, 4294901760
        %308 = vmatpush1.msra.mxu0 %v307
        %309 = vmatprep.subr.mxu0 0.0
        %v310 = vand.u32 %v254, 4294901760
        %311 = vmatpush1.msra.mxu0 %v310
        %312 = vmatprep.subr.mxu0 0.0
        %v313 = vand.u32 %v255, 4294901760
        %314 = vmatpush1.msra.mxu0 %v313
        %315 = vmatprep.subr.mxu0 0.0
        %v316 = vand.u32 %v256, 4294901760
        %317 = vmatpush1.msra.mxu0 %v316
        %318 = vmatprep.subr.mxu0 0.0
        %v319 = vand.u32 %v257, 4294901760
        %320 = vmatpush1.msra.mxu0 %v319
        %321 = vmatprep.subr.mxu0 0.0
        %v322 = vand.u32 %v258, 4294901760
        %323 = vmatpush1.msra.mxu0 %v322
        %324 = vmatprep.subr.mxu0 0.0
        %v325 = vand.u32 %v259, 4294901760
        %326 = vmatpush1.msra.mxu0 %v325
        %327 = vmatprep.subr.mxu0 0.0
        %v328 = vand.u32 %v260, 4294901760
        %329 = vmatpush1.msra.mxu0 %v328
        %330 = vmatprep.subr.mxu0 0.0
        %v331 = vand.u32 %v261, 4294901760
        %332 = vmatpush1.msra.mxu0 %v331
        %333 = vmatprep.subr.mxu0 0.0
        %v334 = vand.u32 %v262, 4294901760
        %335 = vmatpush1.msra.mxu0 %v334
        %336 = vmatprep.subr.mxu0 0.0
        %v337 = vand.u32 %v263, 4294901760
        %338 = vmatpush1.msra.mxu0 %v337
        %339 = vmatprep.subr.mxu0 0.0
        %v340 = vand.u32 %v264, 4294901760
        %341 = vmatpush1.msra.mxu0 %v340
        %342 = vmatprep.subr.mxu0 0.0
        %v343 = vand.u32 %v265, 4294901760
        %344 = vmatpush1.msra.mxu0 %v343
        %345 = vmatprep.subr.mxu0 0.0
        %v346 = vand.u32 %v266, 4294901760
        %347 = vmatpush1.msra.mxu0 %v346
        %348 = vmatprep.subr.mxu0 0.0
        %v349 = vand.u32 %v267, 4294901760
        %350 = vmatpush1.msra.mxu0 %v349
        %351 = vmatprep.subr.mxu0 0.0
        %v352 = vand.u32 %v268, 4294901760
        %353 = vmatpush1.msra.mxu0 %v352
        %354 = vmatprep.subr.mxu0 0.0
        %v355 = vand.u32 %v269, 4294901760
        %356 = vmatpush1.msra.mxu0 %v355
        %357 = vmatprep.subr.mxu0 0.0
        %v358 = vand.u32 %v270, 4294901760
        %359 = vmatpush1.msra.mxu0 %v358
        %360 = vmatprep.subr.mxu0 0.0
        %v361 = vand.u32 %v271, 4294901760
        %362 = vmatpush1.msra.mxu0 %v361
        %363 = vmatprep.subr.mxu0 0.0
        %v364 = vand.u32 %v272, 4294901760
        %365 = vmatpush1.msra.mxu0 %v364
        %366 = vmatprep.subr.mxu0 0.0
        %v367 = vand.u32 %v273, 4294901760
        %368 = vmatpush1.msra.mxu0 %v367
        %369 = vmatprep.subr.mxu0 0.0
        %v370 = vand.u32 %v274, 4294901760
        %371 = vmatpush1.msra.mxu0 %v370
        %372 = vmatprep.subr.mxu0 0.0
        %v373 = vand.u32 %v275, 4294901760
        %374 = vmatpush1.msra.mxu0 %v373
        %375 = vmatprep.subr.mxu0 0.0
        %v376 = vand.u32 %v276, 4294901760
        %377 = vmatpush1.msra.mxu0 %v376
        %378 = vmatprep.subr.mxu0 0.0
        %v379 = vand.u32 %v277, 4294901760
        %380 = vmatpush1.msra.mxu0 %v379
        %v381 = vand.u32 %v243, 4294901760
        %v382 = vsub.f32 %v243, %v381
        %v383 = vand.u32 %v382, 4294901760
        %v384 = vsub.f32 %v382, %v383
        %v385 = vand.u32 %v384, 4294901760
        %386 = vmatprep.mubr.f32.mxu0 %v385
        %v387 = vand.u32 %v242, 4294901760
        %v388 = vsub.f32 %v242, %v387
        %v389 = vand.u32 %v388, 4294901760
        %v390 = vsub.f32 %v388, %v389
        %v391 = vand.u32 %v390, 4294901760
        %392 = vmatmul.mubr.f32.gmra.mrb[0].mxu0 %v391
        %v393 = vpop.f32.mrb[0].mxu0
        %v394 = vadd.f32 %v283, %v393
        %v395 = vpop.f32.mrb[0].mxu0
        %v396 = vand.u32 %v245, 4294901760
        %v397 = vsub.f32 %v245, %v396
        %v398 = vand.u32 %v397, 4294901760
        %v399 = vsub.f32 %v397, %v398
        %v400 = vand.u32 %v399, 4294901760
        %401 = vmatprep.mubr.f32.mxu0 %v400
        %v402 = vand.u32 %v244, 4294901760
        %v403 = vsub.f32 %v244, %v402
        %v404 = vand.u32 %v403, 4294901760
        %v405 = vsub.f32 %v403, %v404
        %v406 = vand.u32 %v405, 4294901760
        %407 = vmatmul.mubr.f32.gmra.mrb[0].mxu0 %v406
        %v408 = vpop.f32.mrb[0].mxu0
        %v409 = vadd.f32 %v283, %v408
        %v410 = vpop.f32.mrb[0].mxu0
        %411 = vdwg.mxu0
        %412 = vmatprep.subr.mxu0 0.0
        %v413 = vand.u32 %v246, 4294901760
        %v414 = vsub.f32 %v246, %v413
        %v415 = vand.u32 %v414, 4294901760
        %v416 = vsub.f32 %v414, %v415
        %v417 = vand.u32 %v416, 4294901760
        %418 = vmatpush1.msra.mxu0 %v417
        %419 = vmatprep.subr.mxu0 0.0
        %v420 = vand.u32 %v247, 4294901760
        %v421 = vsub.f32 %v247, %v420
        %v422 = vand.u32 %v421, 4294901760
        %v423 = vsub.f32 %v421, %v422
        %v424 = vand.u32 %v423, 4294901760
        %425 = vmatpush1.msra.mxu0 %v424
        %426 = vmatprep.subr.mxu0 0.0
        %v427 = vand.u32 %v248, 4294901760
        %v428 = vsub.f32 %v248, %v427
        %v429 = vand.u32 %v428, 4294901760
        %v430 = vsub.f32 %v428, %v429
        %v431 = vand.u32 %v430, 4294901760
        %432 = vmatpush1.msra.mxu0 %v431
        %433 = vmatprep.subr.mxu0 0.0
        %v434 = vand.u32 %v249, 4294901760
        %v435 = vsub.f32 %v249, %v434
        %v436 = vand.u32 %v435, 4294901760
        %v437 = vsub.f32 %v435, %v436
        %v438 = vand.u32 %v437, 4294901760
        %439 = vmatpush1.msra.mxu0 %v438
        %440 = vmatprep.subr.mxu0 0.0
        %v441 = vand.u32 %v250, 4294901760
        %v442 = vsub.f32 %v250, %v441
        %v443 = vand.u32 %v442, 4294901760
        %v444 = vsub.f32 %v442, %v443
        %v445 = vand.u32 %v444, 4294901760
        %446 = vmatpush1.msra.mxu0 %v445
        %447 = vmatprep.subr.mxu0 0.0
        %v448 = vand.u32 %v251, 4294901760
        %v449 = vsub.f32 %v251, %v448
        %v450 = vand.u32 %v449, 4294901760
        %v451 = vsub.f32 %v449, %v450
        %v452 = vand.u32 %v451, 4294901760
        %453 = vmatpush1.msra.mxu0 %v452
        %454 = vmatprep.subr.mxu0 0.0
        %v455 = vand.u32 %v252, 4294901760
        %v456 = vsub.f32 %v252, %v455
        %v457 = vand.u32 %v456, 4294901760
        %v458 = vsub.f32 %v456, %v457
        %v459 = vand.u32 %v458, 4294901760
        %460 = vmatpush1.msra.mxu0 %v459
        %461 = vmatprep.subr.mxu0 0.0
        %v462 = vand.u32 %v253, 4294901760
        %v463 = vsub.f32 %v253, %v462
        %v464 = vand.u32 %v463, 4294901760
        %v465 = vsub.f32 %v463, %v464
        %v466 = vand.u32 %v465, 4294901760
        %467 = vmatpush1.msra.mxu0 %v466
        %468 = vmatprep.subr.mxu0 0.0
        %v469 = vand.u32 %v254, 4294901760
        %v470 = vsub.f32 %v254, %v469
        %v471 = vand.u32 %v470, 4294901760
        %v472 = vsub.f32 %v470, %v471
        %v473 = vand.u32 %v472, 4294901760
        %474 = vmatpush1.msra.mxu0 %v473
        %475 = vmatprep.subr.mxu0 0.0
        %v476 = vand.u32 %v255, 4294901760
        %v477 = vsub.f32 %v255, %v476
        %v478 = vand.u32 %v477, 4294901760
        %v479 = vsub.f32 %v477, %v478
        %v480 = vand.u32 %v479, 4294901760
        %481 = vmatpush1.msra.mxu0 %v480
        %482 = vmatprep.subr.mxu0 0.0
        %v483 = vand.u32 %v256, 4294901760
        %v484 = vsub.f32 %v256, %v483
        %v485 = vand.u32 %v484, 4294901760
        %v486 = vsub.f32 %v484, %v485
        %v487 = vand.u32 %v486, 4294901760
        %488 = vmatpush1.msra.mxu0 %v487
        %489 = vmatprep.subr.mxu0 0.0
        %v490 = vand.u32 %v257, 4294901760
        %v491 = vsub.f32 %v257, %v490
        %v492 = vand.u32 %v491, 4294901760
        %v493 = vsub.f32 %v491, %v492
        %v494 = vand.u32 %v493, 4294901760
        %495 = vmatpush1.msra.mxu0 %v494
        %496 = vmatprep.subr.mxu0 0.0
        %v497 = vand.u32 %v258, 4294901760
        %v498 = vsub.f32 %v258, %v497
        %v499 = vand.u32 %v498, 4294901760
        %v500 = vsub.f32 %v498, %v499
        %v501 = vand.u32 %v500, 4294901760
        %502 = vmatpush1.msra.mxu0 %v501
        %503 = vmatprep.subr.mxu0 0.0
        %v504 = vand.u32 %v259, 4294901760
        %v505 = vsub.f32 %v259, %v504
        %v506 = vand.u32 %v505, 4294901760
        %v507 = vsub.f32 %v505, %v506
        %v508 = vand.u32 %v507, 4294901760
        %509 = vmatpush1.msra.mxu0 %v508
        %510 = vmatprep.subr.mxu0 0.0
        %v511 = vand.u32 %v260, 4294901760
        %v512 = vsub.f32 %v260, %v511
        %v513 = vand.u32 %v512, 4294901760
        %v514 = vsub.f32 %v512, %v513
        %v515 = vand.u32 %v514, 4294901760
        %516 = vmatpush1.msra.mxu0 %v515
        %517 = vmatprep.subr.mxu0 0.0
        %v518 = vand.u32 %v261, 4294901760
        %v519 = vsub.f32 %v261, %v518
        %v520 = vand.u32 %v519, 4294901760
        %v521 = vsub.f32 %v519, %v520
        %v522 = vand.u32 %v521, 4294901760
        %523 = vmatpush1.msra.mxu0 %v522
        %524 = vmatprep.subr.mxu0 0.0
        %v525 = vand.u32 %v262, 4294901760
        %v526 = vsub.f32 %v262, %v525
        %v527 = vand.u32 %v526, 4294901760
        %v528 = vsub.f32 %v526, %v527
        %v529 = vand.u32 %v528, 4294901760
        %530 = vmatpush1.msra.mxu0 %v529
        %531 = vmatprep.subr.mxu0 0.0
        %v532 = vand.u32 %v263, 4294901760
        %v533 = vsub.f32 %v263, %v532
        %v534 = vand.u32 %v533, 4294901760
        %v535 = vsub.f32 %v533, %v534
        %v536 = vand.u32 %v535, 4294901760
        %537 = vmatpush1.msra.mxu0 %v536
        %538 = vmatprep.subr.mxu0 0.0
        %v539 = vand.u32 %v264, 4294901760
        %v540 = vsub.f32 %v264, %v539
        %v541 = vand.u32 %v540, 4294901760
        %v542 = vsub.f32 %v540, %v541
        %v543 = vand.u32 %v542, 4294901760
        %544 = vmatpush1.msra.mxu0 %v543
        %545 = vmatprep.subr.mxu0 0.0
        %v546 = vand.u32 %v265, 4294901760
        %v547 = vsub.f32 %v265, %v546
        %v548 = vand.u32 %v547, 4294901760
        %v549 = vsub.f32 %v547, %v548
        %v550 = vand.u32 %v549, 4294901760
        %551 = vmatpush1.msra.mxu0 %v550
        %552 = vmatprep.subr.mxu0 0.0
        %v553 = vand.u32 %v266, 4294901760
        %v554 = vsub.f32 %v266, %v553
        %v555 = vand.u32 %v554, 4294901760
        %v556 = vsub.f32 %v554, %v555
        %v557 = vand.u32 %v556, 4294901760
        %558 = vmatpush1.msra.mxu0 %v557
        %559 = vmatprep.subr.mxu0 0.0
        %v560 = vand.u32 %v267, 4294901760
        %v561 = vsub.f32 %v267, %v560
        %v562 = vand.u32 %v561, 4294901760
        %v563 = vsub.f32 %v561, %v562
        %v564 = vand.u32 %v563, 4294901760
        %565 = vmatpush1.msra.mxu0 %v564
        %566 = vmatprep.subr.mxu0 0.0
        %v567 = vand.u32 %v268, 4294901760
        %v568 = vsub.f32 %v268, %v567
        %v569 = vand.u32 %v568, 4294901760
        %v570 = vsub.f32 %v568, %v569
        %v571 = vand.u32 %v570, 4294901760
        %572 = vmatpush1.msra.mxu0 %v571
        %573 = vmatprep.subr.mxu0 0.0
        %v574 = vand.u32 %v269, 4294901760
        %v575 = vsub.f32 %v269, %v574
        %v576 = vand.u32 %v575, 4294901760
        %v577 = vsub.f32 %v575, %v576
        %v578 = vand.u32 %v577, 4294901760
        %579 = vmatpush1.msra.mxu0 %v578
        %580 = vmatprep.subr.mxu0 0.0
        %v581 = vand.u32 %v270, 4294901760
        %v582 = vsub.f32 %v270, %v581
        %v583 = vand.u32 %v582, 4294901760
        %v584 = vsub.f32 %v582, %v583
        %v585 = vand.u32 %v584, 4294901760
        %586 = vmatpush1.msra.mxu0 %v585
        %587 = vmatprep.subr.mxu0 0.0
        %v588 = vand.u32 %v271, 4294901760
        %v589 = vsub.f32 %v271, %v588
        %v590 = vand.u32 %v589, 4294901760
        %v591 = vsub.f32 %v589, %v590
        %v592 = vand.u32 %v591, 4294901760
        %593 = vmatpush1.msra.mxu0 %v592
        %594 = vmatprep.subr.mxu0 0.0
        %v595 = vand.u32 %v272, 4294901760
        %v596 = vsub.f32 %v272, %v595
        %v597 = vand.u32 %v596, 4294901760
        %v598 = vsub.f32 %v596, %v597
        %v599 = vand.u32 %v598, 4294901760
        %600 = vmatpush1.msra.mxu0 %v599
        %601 = vmatprep.subr.mxu0 0.0
        %v602 = vand.u32 %v273, 4294901760
        %v603 = vsub.f32 %v273, %v602
        %v604 = vand.u32 %v603, 4294901760
        %v605 = vsub.f32 %v603, %v604
        %v606 = vand.u32 %v605, 4294901760
        %607 = vmatpush1.msra.mxu0 %v606
        %608 = vmatprep.subr.mxu0 0.0
        %v609 = vand.u32 %v274, 4294901760
        %v610 = vsub.f32 %v274, %v609
        %v611 = vand.u32 %v610, 4294901760
        %v612 = vsub.f32 %v610, %v611
        %v613 = vand.u32 %v612, 4294901760
        %614 = vmatpush1.msra.mxu0 %v613
        %615 = vmatprep.subr.mxu0 0.0
        %v616 = vand.u32 %v275, 4294901760
        %v617 = vsub.f32 %v275, %v616
        %v618 = vand.u32 %v617, 4294901760
        %v619 = vsub.f32 %v617, %v618
        %v620 = vand.u32 %v619, 4294901760
        %621 = vmatpush1.msra.mxu0 %v620
        %622 = vmatprep.subr.mxu0 0.0
        %v623 = vand.u32 %v276, 4294901760
        %v624 = vsub.f32 %v276, %v623
        %v625 = vand.u32 %v624, 4294901760
        %v626 = vsub.f32 %v624, %v625
        %v627 = vand.u32 %v626, 4294901760
        %628 = vmatpush1.msra.mxu0 %v627
        %629 = vmatprep.subr.mxu0 0.0
        %v630 = vand.u32 %v277, 4294901760
        %v631 = vsub.f32 %v277, %v630
        %v632 = vand.u32 %v631, 4294901760
        %v633 = vsub.f32 %v631, %v632
        %v634 = vand.u32 %v633, 4294901760
        %635 = vmatpush1.msra.mxu0 %v634
        %v636 = vand.u32 %v243, 4294901760
        %637 = vmatprep.mubr.f32.mxu0 %v636
        %v638 = vand.u32 %v242, 4294901760
        %639 = vmatmul.mubr.f32.gmra.mrb[0].mxu0 %v638
        %v640 = vpop.f32.mrb[0].mxu0
        %v641 = vadd.f32 %v394, %v640
        %v642 = vpop.f32.mrb[0].mxu0
        %v643 = vand.u32 %v245, 4294901760
        %644 = vmatprep.mubr.f32.mxu0 %v643
        %v645 = vand.u32 %v244, 4294901760
        %646 = vmatmul.mubr.f32.gmra.mrb[0].mxu0 %v645
        %v647 = vpop.f32.mrb[0].mxu0
        %v648 = vadd.f32 %v409, %v647
        %v649 = vpop.f32.mrb[0].mxu0
        %650 = vdwg.mxu0
        %651 = vmatprep.subr.mxu0 0.0
        %v652 = vand.u32 %v246, 4294901760
        %v653 = vsub.f32 %v246, %v652
        %654 = vmatpush1.msra.mxu0 %v653
        %655 = vmatprep.subr.mxu0 0.0
        %v656 = vand.u32 %v247, 4294901760
        %v657 = vsub.f32 %v247, %v656
        %658 = vmatpush1.msra.mxu0 %v657
        %659 = vmatprep.subr.mxu0 0.0
        %v660 = vand.u32 %v248, 4294901760
        %v661 = vsub.f32 %v248, %v660
        %662 = vmatpush1.msra.mxu0 %v661
        %663 = vmatprep.subr.mxu0 0.0
        %v664 = vand.u32 %v249, 4294901760
        %v665 = vsub.f32 %v249, %v664
        %666 = vmatpush1.msra.mxu0 %v665
        %667 = vmatprep.subr.mxu0 0.0
        %v668 = vand.u32 %v250, 4294901760
        %v669 = vsub.f32 %v250, %v668
        %670 = vmatpush1.msra.mxu0 %v669
        %671 = vmatprep.subr.mxu0 0.0
        %v672 = vand.u32 %v251, 4294901760
        %v673 = vsub.f32 %v251, %v672
        %674 = vmatpush1.msra.mxu0 %v673
        %675 = vmatprep.subr.mxu0 0.0
        %v676 = vand.u32 %v252, 4294901760
        %v677 = vsub.f32 %v252, %v676
        %678 = vmatpush1.msra.mxu0 %v677
        %679 = vmatprep.subr.mxu0 0.0
        %v680 = vand.u32 %v253, 4294901760
        %v681 = vsub.f32 %v253, %v680
        %682 = vmatpush1.msra.mxu0 %v681
        %683 = vmatprep.subr.mxu0 0.0
        %v684 = vand.u32 %v254, 4294901760
        %v685 = vsub.f32 %v254, %v684
        %686 = vmatpush1.msra.mxu0 %v685
        %687 = vmatprep.subr.mxu0 0.0
        %v688 = vand.u32 %v255, 4294901760
        %v689 = vsub.f32 %v255, %v688
        %690 = vmatpush1.msra.mxu0 %v689
        %691 = vmatprep.subr.mxu0 0.0
        %v692 = vand.u32 %v256, 4294901760
        %v693 = vsub.f32 %v256, %v692
        %694 = vmatpush1.msra.mxu0 %v693
        %695 = vmatprep.subr.mxu0 0.0
        %v696 = vand.u32 %v257, 4294901760
        %v697 = vsub.f32 %v257, %v696
        %698 = vmatpush1.msra.mxu0 %v697
        %699 = vmatprep.subr.mxu0 0.0
        %v700 = vand.u32 %v258, 4294901760
        %v701 = vsub.f32 %v258, %v700
        %702 = vmatpush1.msra.mxu0 %v701
        %703 = vmatprep.subr.mxu0 0.0
        %v704 = vand.u32 %v259, 4294901760
        %v705 = vsub.f32 %v259, %v704
        %706 = vmatpush1.msra.mxu0 %v705
        %707 = vmatprep.subr.mxu0 0.0
        %v708 = vand.u32 %v260, 4294901760
        %v709 = vsub.f32 %v260, %v708
        %710 = vmatpush1.msra.mxu0 %v709
        %711 = vmatprep.subr.mxu0 0.0
        %v712 = vand.u32 %v261, 4294901760
        %v713 = vsub.f32 %v261, %v712
        %714 = vmatpush1.msra.mxu0 %v713
        %715 = vmatprep.subr.mxu0 0.0
        %v716 = vand.u32 %v262, 4294901760
        %v717 = vsub.f32 %v262, %v716
        %718 = vmatpush1.msra.mxu0 %v717
        %719 = vmatprep.subr.mxu0 0.0
        %v720 = vand.u32 %v263, 4294901760
        %v721 = vsub.f32 %v263, %v720
        %722 = vmatpush1.msra.mxu0 %v721
        %723 = vmatprep.subr.mxu0 0.0
        %v724 = vand.u32 %v264, 4294901760
        %v725 = vsub.f32 %v264, %v724
        %726 = vmatpush1.msra.mxu0 %v725
        %727 = vmatprep.subr.mxu0 0.0
        %v728 = vand.u32 %v265, 4294901760
        %v729 = vsub.f32 %v265, %v728
        %730 = vmatpush1.msra.mxu0 %v729
        %731 = vmatprep.subr.mxu0 0.0
        %v732 = vand.u32 %v266, 4294901760
        %v733 = vsub.f32 %v266, %v732
        %734 = vmatpush1.msra.mxu0 %v733
        %735 = vmatprep.subr.mxu0 0.0
        %v736 = vand.u32 %v267, 4294901760
        %v737 = vsub.f32 %v267, %v736
        %738 = vmatpush1.msra.mxu0 %v737
        %739 = vmatprep.subr.mxu0 0.0
        %v740 = vand.u32 %v268, 4294901760
        %v741 = vsub.f32 %v268, %v740
        %742 = vmatpush1.msra.mxu0 %v741
        %743 = vmatprep.subr.mxu0 0.0
        %v744 = vand.u32 %v269, 4294901760
        %v745 = vsub.f32 %v269, %v744
        %746 = vmatpush1.msra.mxu0 %v745
        %747 = vmatprep.subr.mxu0 0.0
        %v748 = vand.u32 %v270, 4294901760
        %v749 = vsub.f32 %v270, %v748
        %750 = vmatpush1.msra.mxu0 %v749
        %751 = vmatprep.subr.mxu0 0.0
        %v752 = vand.u32 %v271, 4294901760
        %v753 = vsub.f32 %v271, %v752
        %754 = vmatpush1.msra.mxu0 %v753
        %755 = vmatprep.subr.mxu0 0.0
        %v756 = vand.u32 %v272, 4294901760
        %v757 = vsub.f32 %v272, %v756
        %758 = vmatpush1.msra.mxu0 %v757
        %759 = vmatprep.subr.mxu0 0.0
        %v760 = vand.u32 %v273, 4294901760
        %v761 = vsub.f32 %v273, %v760
        %762 = vmatpush1.msra.mxu0 %v761
        %763 = vmatprep.subr.mxu0 0.0
        %v764 = vand.u32 %v274, 4294901760
        %v765 = vsub.f32 %v274, %v764
        %766 = vmatpush1.msra.mxu0 %v765
        %767 = vmatprep.subr.mxu0 0.0
        %v768 = vand.u32 %v275, 4294901760
        %v769 = vsub.f32 %v275, %v768
        %770 = vmatpush1.msra.mxu0 %v769
        %771 = vmatprep.subr.mxu0 0.0
        %v772 = vand.u32 %v276, 4294901760
        %v773 = vsub.f32 %v276, %v772
        %774 = vmatpush1.msra.mxu0 %v773
        %775 = vmatprep.subr.mxu0 0.0
        %v776 = vand.u32 %v277, 4294901760
        %v777 = vsub.f32 %v277, %v776
        %778 = vmatpush1.msra.mxu0 %v777
        %v779 = vand.u32 %v243, 4294901760
        %v780 = vsub.f32 %v243, %v779
        %781 = vmatprep.mubr.f32.mxu0 %v780
        %v782 = vand.u32 %v242, 4294901760
        %v783 = vsub.f32 %v242, %v782
        %784 = vmatmul.mubr.f32.gmra.mrb[0].mxu0 %v783
        %v785 = vpop.f32.mrb[0].mxu0
        %v786 = vadd.f32 %v641, %v785
        %v787 = vpop.f32.mrb[0].mxu0
        %v788 = vand.u32 %v245, 4294901760
        %v789 = vsub.f32 %v245, %v788
        %790 = vmatprep.mubr.f32.mxu0 %v789
        %v791 = vand.u32 %v244, 4294901760
        %v792 = vsub.f32 %v244, %v791
        %793 = vmatmul.mubr.f32.gmra.mrb[0].mxu0 %v792
        %v794 = vpop.f32.mrb[0].mxu0
        %v795 = vadd.f32 %v648, %v794
        %v796 = vpop.f32.mrb[0].mxu0
        %797 = vdwg.mxu0
        %798 = vmatprep.subr.mxu0 0.0
        %v799 = vand.u32 %v246, 4294901760
        %800 = vmatpush1.msra.mxu0 %v799
        %801 = vmatprep.subr.mxu0 0.0
        %v802 = vand.u32 %v247, 4294901760
        %803 = vmatpush1.msra.mxu0 %v802
        %804 = vmatprep.subr.mxu0 0.0
        %v805 = vand.u32 %v248, 4294901760
        %806 = vmatpush1.msra.mxu0 %v805
        %807 = vmatprep.subr.mxu0 0.0
        %v808 = vand.u32 %v249, 4294901760
        %809 = vmatpush1.msra.mxu0 %v808
        %810 = vmatprep.subr.mxu0 0.0
        %v811 = vand.u32 %v250, 4294901760
        %812 = vmatpush1.msra.mxu0 %v811
        %813 = vmatprep.subr.mxu0 0.0
        %v814 = vand.u32 %v251, 4294901760
        %815 = vmatpush1.msra.mxu0 %v814
        %816 = vmatprep.subr.mxu0 0.0
        %v817 = vand.u32 %v252, 4294901760
        %818 = vmatpush1.msra.mxu0 %v817
        %819 = vmatprep.subr.mxu0 0.0
        %v820 = vand.u32 %v253, 4294901760
        %821 = vmatpush1.msra.mxu0 %v820
        %822 = vmatprep.subr.mxu0 0.0
        %v823 = vand.u32 %v254, 4294901760
        %824 = vmatpush1.msra.mxu0 %v823
        %825 = vmatprep.subr.mxu0 0.0
        %v826 = vand.u32 %v255, 4294901760
        %827 = vmatpush1.msra.mxu0 %v826
        %828 = vmatprep.subr.mxu0 0.0
        %v829 = vand.u32 %v256, 4294901760
        %830 = vmatpush1.msra.mxu0 %v829
        %831 = vmatprep.subr.mxu0 0.0
        %v832 = vand.u32 %v257, 4294901760
        %833 = vmatpush1.msra.mxu0 %v832
        %834 = vmatprep.subr.mxu0 0.0
        %v835 = vand.u32 %v258, 4294901760
        %836 = vmatpush1.msra.mxu0 %v835
        %837 = vmatprep.subr.mxu0 0.0
        %v838 = vand.u32 %v259, 4294901760
        %839 = vmatpush1.msra.mxu0 %v838
        %840 = vmatprep.subr.mxu0 0.0
        %v841 = vand.u32 %v260, 4294901760
        %842 = vmatpush1.msra.mxu0 %v841
        %843 = vmatprep.subr.mxu0 0.0
        %v844 = vand.u32 %v261, 4294901760
        %845 = vmatpush1.msra.mxu0 %v844
        %846 = vmatprep.subr.mxu0 0.0
        %v847 = vand.u32 %v262, 4294901760
        %848 = vmatpush1.msra.mxu0 %v847
        %849 = vmatprep.subr.mxu0 0.0
        %v850 = vand.u32 %v263, 4294901760
        %851 = vmatpush1.msra.mxu0 %v850
        %852 = vmatprep.subr.mxu0 0.0
        %v853 = vand.u32 %v264, 4294901760
        %854 = vmatpush1.msra.mxu0 %v853
        %855 = vmatprep.subr.mxu0 0.0
        %v856 = vand.u32 %v265, 4294901760
        %857 = vmatpush1.msra.mxu0 %v856
        %858 = vmatprep.subr.mxu0 0.0
        %v859 = vand.u32 %v266, 4294901760
        %860 = vmatpush1.msra.mxu0 %v859
        %861 = vmatprep.subr.mxu0 0.0
        %v862 = vand.u32 %v267, 4294901760
        %863 = vmatpush1.msra.mxu0 %v862
        %864 = vmatprep.subr.mxu0 0.0
        %v865 = vand.u32 %v268, 4294901760
        %866 = vmatpush1.msra.mxu0 %v865
        %867 = vmatprep.subr.mxu0 0.0
        %v868 = vand.u32 %v269, 4294901760
        %869 = vmatpush1.msra.mxu0 %v868
        %870 = vmatprep.subr.mxu0 0.0
        %v871 = vand.u32 %v270, 4294901760
        %872 = vmatpush1.msra.mxu0 %v871
        %873 = vmatprep.subr.mxu0 0.0
        %v874 = vand.u32 %v271, 4294901760
        %875 = vmatpush1.msra.mxu0 %v874
        %876 = vmatprep.subr.mxu0 0.0
        %v877 = vand.u32 %v272, 4294901760
        %878 = vmatpush1.msra.mxu0 %v877
        %879 = vmatprep.subr.mxu0 0.0
        %v880 = vand.u32 %v273, 4294901760
        %881 = vmatpush1.msra.mxu0 %v880
        %882 = vmatprep.subr.mxu0 0.0
        %v883 = vand.u32 %v274, 4294901760
        %884 = vmatpush1.msra.mxu0 %v883
        %885 = vmatprep.subr.mxu0 0.0
        %v886 = vand.u32 %v275, 4294901760
        %887 = vmatpush1.msra.mxu0 %v886
        %888 = vmatprep.subr.mxu0 0.0
        %v889 = vand.u32 %v276, 4294901760
        %890 = vmatpush1.msra.mxu0 %v889
        %891 = vmatprep.subr.mxu0 0.0
        %v892 = vand.u32 %v277, 4294901760
        %893 = vmatpush1.msra.mxu0 %v892
        %v894 = vand.u32 %v243, 4294901760
        %v895 = vsub.f32 %v243, %v894
        %v896 = vand.u32 %v895, 4294901760
        %897 = vmatprep.mubr.f32.mxu0 %v896
        %v898 = vand.u32 %v242, 4294901760
        %v899 = vsub.f32 %v242, %v898
        %v900 = vand.u32 %v899, 4294901760
        %901 = vmatmul.mubr.f32.gmra.mrb[0].mxu0 %v900
        %v902 = vpop.f32.mrb[0].mxu0
        %v903 = vadd.f32 %v786, %v902
        %v904 = vpop.f32.mrb[0].mxu0
        %v905 = vand.u32 %v245, 4294901760
        %v906 = vsub.f32 %v245, %v905
        %v907 = vand.u32 %v906, 4294901760
        %908 = vmatprep.mubr.f32.mxu0 %v907
        %v909 = vand.u32 %v244, 4294901760
        %v910 = vsub.f32 %v244, %v909
        %v911 = vand.u32 %v910, 4294901760
        %912 = vmatmul.mubr.f32.gmra.mrb[0].mxu0 %v911
        %v913 = vpop.f32.mrb[0].mxu0
        %v914 = vadd.f32 %v795, %v913
        %v915 = vpop.f32.mrb[0].mxu0
        %916 = vdwg.mxu0
        %917 = vmatprep.subr.mxu0 0.0
        %v918 = vand.u32 %v246, 4294901760
        %v919 = vsub.f32 %v246, %v918
        %v920 = vand.u32 %v919, 4294901760
        %921 = vmatpush1.msra.mxu0 %v920
        %922 = vmatprep.subr.mxu0 0.0
        %v923 = vand.u32 %v247, 4294901760
        %v924 = vsub.f32 %v247, %v923
        %v925 = vand.u32 %v924, 4294901760
        %926 = vmatpush1.msra.mxu0 %v925
        %927 = vmatprep.subr.mxu0 0.0
        %v928 = vand.u32 %v248, 4294901760
        %v929 = vsub.f32 %v248, %v928
        %v930 = vand.u32 %v929, 4294901760
        %931 = vmatpush1.msra.mxu0 %v930
        %932 = vmatprep.subr.mxu0 0.0
        %v933 = vand.u32 %v249, 4294901760
        %v934 = vsub.f32 %v249, %v933
        %v935 = vand.u32 %v934, 4294901760
        %936 = vmatpush1.msra.mxu0 %v935
        %937 = vmatprep.subr.mxu0 0.0
        %v938 = vand.u32 %v250, 4294901760
        %v939 = vsub.f32 %v250, %v938
        %v940 = vand.u32 %v939, 4294901760
        %941 = vmatpush1.msra.mxu0 %v940
        %942 = vmatprep.subr.mxu0 0.0
        %v943 = vand.u32 %v251, 4294901760
        %v944 = vsub.f32 %v251, %v943
        %v945 = vand.u32 %v944, 4294901760
        %946 = vmatpush1.msra.mxu0 %v945
        %947 = vmatprep.subr.mxu0 0.0
        %v948 = vand.u32 %v252, 4294901760
        %v949 = vsub.f32 %v252, %v948
        %v950 = vand.u32 %v949, 4294901760
        %951 = vmatpush1.msra.mxu0 %v950
        %952 = vmatprep.subr.mxu0 0.0
        %v953 = vand.u32 %v253, 4294901760
        %v954 = vsub.f32 %v253, %v953
        %v955 = vand.u32 %v954, 4294901760
        %956 = vmatpush1.msra.mxu0 %v955
        %957 = vmatprep.subr.mxu0 0.0
        %v958 = vand.u32 %v254, 4294901760
        %v959 = vsub.f32 %v254, %v958
        %v960 = vand.u32 %v959, 4294901760
        %961 = vmatpush1.msra.mxu0 %v960
        %962 = vmatprep.subr.mxu0 0.0
        %v963 = vand.u32 %v255, 4294901760
        %v964 = vsub.f32 %v255, %v963
        %v965 = vand.u32 %v964, 4294901760
        %966 = vmatpush1.msra.mxu0 %v965
        %967 = vmatprep.subr.mxu0 0.0
        %v968 = vand.u32 %v256, 4294901760
        %v969 = vsub.f32 %v256, %v968
        %v970 = vand.u32 %v969, 4294901760
        %971 = vmatpush1.msra.mxu0 %v970
        %972 = vmatprep.subr.mxu0 0.0
        %v973 = vand.u32 %v257, 4294901760
        %v974 = vsub.f32 %v257, %v973
        %v975 = vand.u32 %v974, 4294901760
        %976 = vmatpush1.msra.mxu0 %v975
        %977 = vmatprep.subr.mxu0 0.0
        %v978 = vand.u32 %v258, 4294901760
        %v979 = vsub.f32 %v258, %v978
        %v980 = vand.u32 %v979, 4294901760
        %981 = vmatpush1.msra.mxu0 %v980
        %982 = vmatprep.subr.mxu0 0.0
        %v983 = vand.u32 %v259, 4294901760
        %v984 = vsub.f32 %v259, %v983
        %v985 = vand.u32 %v984, 4294901760
        %986 = vmatpush1.msra.mxu0 %v985
        %987 = vmatprep.subr.mxu0 0.0
        %v988 = vand.u32 %v260, 4294901760
        %v989 = vsub.f32 %v260, %v988
        %v990 = vand.u32 %v989, 4294901760
        %991 = vmatpush1.msra.mxu0 %v990
        %992 = vmatprep.subr.mxu0 0.0
        %v993 = vand.u32 %v261, 4294901760
        %v994 = vsub.f32 %v261, %v993
        %v995 = vand.u32 %v994, 4294901760
        %996 = vmatpush1.msra.mxu0 %v995
        %997 = vmatprep.subr.mxu0 0.0
        %v998 = vand.u32 %v262, 4294901760
        %v999 = vsub.f32 %v262, %v998
        %v1000 = vand.u32 %v999, 4294901760
        %1001 = vmatpush1.msra.mxu0 %v1000
        %1002 = vmatprep.subr.mxu0 0.0
        %v1003 = vand.u32 %v263, 4294901760
        %v1004 = vsub.f32 %v263, %v1003
        %v1005 = vand.u32 %v1004, 4294901760
        %1006 = vmatpush1.msra.mxu0 %v1005
        %1007 = vmatprep.subr.mxu0 0.0
        %v1008 = vand.u32 %v264, 4294901760
        %v1009 = vsub.f32 %v264, %v1008
        %v1010 = vand.u32 %v1009, 4294901760
        %1011 = vmatpush1.msra.mxu0 %v1010
        %1012 = vmatprep.subr.mxu0 0.0
        %v1013 = vand.u32 %v265, 4294901760
        %v1014 = vsub.f32 %v265, %v1013
        %v1015 = vand.u32 %v1014, 4294901760
        %1016 = vmatpush1.msra.mxu0 %v1015
        %1017 = vmatprep.subr.mxu0 0.0
        %v1018 = vand.u32 %v266, 4294901760
        %v1019 = vsub.f32 %v266, %v1018
        %v1020 = vand.u32 %v1019, 4294901760
        %1021 = vmatpush1.msra.mxu0 %v1020
        %1022 = vmatprep.subr.mxu0 0.0
        %v1023 = vand.u32 %v267, 4294901760
        %v1024 = vsub.f32 %v267, %v1023
        %v1025 = vand.u32 %v1024, 4294901760
        %1026 = vmatpush1.msra.mxu0 %v1025
        %1027 = vmatprep.subr.mxu0 0.0
        %v1028 = vand.u32 %v268, 4294901760
        %v1029 = vsub.f32 %v268, %v1028
        %v1030 = vand.u32 %v1029, 4294901760
        %1031 = vmatpush1.msra.mxu0 %v1030
        %1032 = vmatprep.subr.mxu0 0.0
        %v1033 = vand.u32 %v269, 4294901760
        %v1034 = vsub.f32 %v269, %v1033
        %v1035 = vand.u32 %v1034, 4294901760
        %1036 = vmatpush1.msra.mxu0 %v1035
        %1037 = vmatprep.subr.mxu0 0.0
        %v1038 = vand.u32 %v270, 4294901760
        %v1039 = vsub.f32 %v270, %v1038
        %v1040 = vand.u32 %v1039, 4294901760
        %1041 = vmatpush1.msra.mxu0 %v1040
        %1042 = vmatprep.subr.mxu0 0.0
        %v1043 = vand.u32 %v271, 4294901760
        %v1044 = vsub.f32 %v271, %v1043
        %v1045 = vand.u32 %v1044, 4294901760
        %1046 = vmatpush1.msra.mxu0 %v1045
        %1047 = vmatprep.subr.mxu0 0.0
        %v1048 = vand.u32 %v272, 4294901760
        %v1049 = vsub.f32 %v272, %v1048
        %v1050 = vand.u32 %v1049, 4294901760
        %1051 = vmatpush1.msra.mxu0 %v1050
        %1052 = vmatprep.subr.mxu0 0.0
        %v1053 = vand.u32 %v273, 4294901760
        %v1054 = vsub.f32 %v273, %v1053
        %v1055 = vand.u32 %v1054, 4294901760
        %1056 = vmatpush1.msra.mxu0 %v1055
        %1057 = vmatprep.subr.mxu0 0.0
        %v1058 = vand.u32 %v274, 4294901760
        %v1059 = vsub.f32 %v274, %v1058
        %v1060 = vand.u32 %v1059, 4294901760
        %1061 = vmatpush1.msra.mxu0 %v1060
        %1062 = vmatprep.subr.mxu0 0.0
        %v1063 = vand.u32 %v275, 4294901760
        %v1064 = vsub.f32 %v275, %v1063
        %v1065 = vand.u32 %v1064, 4294901760
        %1066 = vmatpush1.msra.mxu0 %v1065
        %1067 = vmatprep.subr.mxu0 0.0
        %v1068 = vand.u32 %v276, 4294901760
        %v1069 = vsub.f32 %v276, %v1068
        %v1070 = vand.u32 %v1069, 4294901760
        %1071 = vmatpush1.msra.mxu0 %v1070
        %1072 = vmatprep.subr.mxu0 0.0
        %v1073 = vand.u32 %v277, 4294901760
        %v1074 = vsub.f32 %v277, %v1073
        %v1075 = vand.u32 %v1074, 4294901760
        %1076 = vmatpush1.msra.mxu0 %v1075
        %v1077 = vand.u32 %v243, 4294901760
        %1078 = vmatprep.mubr.f32.mxu0 %v1077
        %v1079 = vand.u32 %v242, 4294901760
        %1080 = vmatmul.mubr.f32.gmra.mrb[0].mxu0 %v1079
        %v1081 = vpop.f32.mrb[0].mxu0
        %v1082 = vadd.f32 %v903, %v1081
        %v1083 = vpop.f32.mrb[0].mxu0
        %v1084 = vand.u32 %v245, 4294901760
        %1085 = vmatprep.mubr.f32.mxu0 %v1084
        %v1086 = vand.u32 %v244, 4294901760
        %1087 = vmatmul.mubr.f32.gmra.mrb[0].mxu0 %v1086
        %v1088 = vpop.f32.mrb[0].mxu0
        %v1089 = vadd.f32 %v914, %v1088
        %v1090 = vpop.f32.mrb[0].mxu0
        %1091 = vdwg.mxu0
        %1092 = vmatprep.subr.mxu0 0.0
        %v1093 = vand.u32 %v246, 4294901760
        %1094 = vmatpush1.msra.mxu0 %v1093
        %1095 = vmatprep.subr.mxu0 0.0
        %v1096 = vand.u32 %v247, 4294901760
        %1097 = vmatpush1.msra.mxu0 %v1096
        %1098 = vmatprep.subr.mxu0 0.0
        %v1099 = vand.u32 %v248, 4294901760
        %1100 = vmatpush1.msra.mxu0 %v1099
        %1101 = vmatprep.subr.mxu0 0.0
        %v1102 = vand.u32 %v249, 4294901760
        %1103 = vmatpush1.msra.mxu0 %v1102
        %1104 = vmatprep.subr.mxu0 0.0
        %v1105 = vand.u32 %v250, 4294901760
        %1106 = vmatpush1.msra.mxu0 %v1105
        %1107 = vmatprep.subr.mxu0 0.0
        %v1108 = vand.u32 %v251, 4294901760
        %1109 = vmatpush1.msra.mxu0 %v1108
        %1110 = vmatprep.subr.mxu0 0.0
        %v1111 = vand.u32 %v252, 4294901760
        %1112 = vmatpush1.msra.mxu0 %v1111
        %1113 = vmatprep.subr.mxu0 0.0
        %v1114 = vand.u32 %v253, 4294901760
        %1115 = vmatpush1.msra.mxu0 %v1114
        %1116 = vmatprep.subr.mxu0 0.0
        %v1117 = vand.u32 %v254, 4294901760
        %1118 = vmatpush1.msra.mxu0 %v1117
        %1119 = vmatprep.subr.mxu0 0.0
        %v1120 = vand.u32 %v255, 4294901760
        %1121 = vmatpush1.msra.mxu0 %v1120
        %1122 = vmatprep.subr.mxu0 0.0
        %v1123 = vand.u32 %v256, 4294901760
        %1124 = vmatpush1.msra.mxu0 %v1123
        %1125 = vmatprep.subr.mxu0 0.0
        %v1126 = vand.u32 %v257, 4294901760
        %1127 = vmatpush1.msra.mxu0 %v1126
        %1128 = vmatprep.subr.mxu0 0.0
        %v1129 = vand.u32 %v258, 4294901760
        %1130 = vmatpush1.msra.mxu0 %v1129
        %1131 = vmatprep.subr.mxu0 0.0
        %v1132 = vand.u32 %v259, 4294901760
        %1133 = vmatpush1.msra.mxu0 %v1132
        %1134 = vmatprep.subr.mxu0 0.0
        %v1135 = vand.u32 %v260, 4294901760
        %1136 = vmatpush1.msra.mxu0 %v1135
        %1137 = vmatprep.subr.mxu0 0.0
        %v1138 = vand.u32 %v261, 4294901760
        %1139 = vmatpush1.msra.mxu0 %v1138
        %1140 = vmatprep.subr.mxu0 0.0
        %v1141 = vand.u32 %v262, 4294901760
        %1142 = vmatpush1.msra.mxu0 %v1141
        %1143 = vmatprep.subr.mxu0 0.0
        %v1144 = vand.u32 %v263, 4294901760
        %1145 = vmatpush1.msra.mxu0 %v1144
        %1146 = vmatprep.subr.mxu0 0.0
        %v1147 = vand.u32 %v264, 4294901760
        %1148 = vmatpush1.msra.mxu0 %v1147
        %1149 = vmatprep.subr.mxu0 0.0
        %v1150 = vand.u32 %v265, 4294901760
        %1151 = vmatpush1.msra.mxu0 %v1150
        %1152 = vmatprep.subr.mxu0 0.0
        %v1153 = vand.u32 %v266, 4294901760
        %1154 = vmatpush1.msra.mxu0 %v1153
        %1155 = vmatprep.subr.mxu0 0.0
        %v1156 = vand.u32 %v267, 4294901760
        %1157 = vmatpush1.msra.mxu0 %v1156
        %1158 = vmatprep.subr.mxu0 0.0
        %v1159 = vand.u32 %v268, 4294901760
        %1160 = vmatpush1.msra.mxu0 %v1159
        %1161 = vmatprep.subr.mxu0 0.0
        %v1162 = vand.u32 %v269, 4294901760
        %1163 = vmatpush1.msra.mxu0 %v1162
        %1164 = vmatprep.subr.mxu0 0.0
        %v1165 = vand.u32 %v270, 4294901760
        %1166 = vmatpush1.msra.mxu0 %v1165
        %1167 = vmatprep.subr.mxu0 0.0
        %v1168 = vand.u32 %v271, 4294901760
        %1169 = vmatpush1.msra.mxu0 %v1168
        %1170 = vmatprep.subr.mxu0 0.0
        %v1171 = vand.u32 %v272, 4294901760
        %1172 = vmatpush1.msra.mxu0 %v1171
        %1173 = vmatprep.subr.mxu0 0.0
        %v1174 = vand.u32 %v273, 4294901760
        %1175 = vmatpush1.msra.mxu0 %v1174
        %1176 = vmatprep.subr.mxu0 0.0
        %v1177 = vand.u32 %v274, 4294901760
        %1178 = vmatpush1.msra.mxu0 %v1177
        %1179 = vmatprep.subr.mxu0 0.0
        %v1180 = vand.u32 %v275, 4294901760
        %1181 = vmatpush1.msra.mxu0 %v1180
        %1182 = vmatprep.subr.mxu0 0.0
        %v1183 = vand.u32 %v276, 4294901760
        %1184 = vmatpush1.msra.mxu0 %v1183
        %1185 = vmatprep.subr.mxu0 0.0
        %v1186 = vand.u32 %v277, 4294901760
        %1187 = vmatpush1.msra.mxu0 %v1186
        %v1188 = vand.u32 %v243, 4294901760
        %1189 = vmatprep.mubr.f32.mxu0 %v1188
        %v1190 = vand.u32 %v242, 4294901760
        %1191 = vmatmul.mubr.f32.gmra.mrb[0].mxu0 %v1190
        %v1192 = vpop.f32.mrb[0].mxu0
        %v1193 = vadd.f32 %v1082, %v1192
        %v1194 = vpop.f32.mrb[0].mxu0
        %v1195 = vand.u32 %v245, 4294901760
        %1196 = vmatprep.mubr.f32.mxu0 %v1195
        %v1197 = vand.u32 %v244, 4294901760
        %1198 = vmatmul.mubr.f32.gmra.mrb[0].mxu0 %v1197
        %v1199 = vpop.f32.mrb[0].mxu0
        %v1200 = vadd.f32 %v1089, %v1199
        %v1201 = vpop.f32.mrb[0].mxu0
        %1202 = vdwg.mxu0
        %v1203 = vtanh.pop %v1193
        %v1204 = vtanh.pop %v1200
        %1205 = vst [vmem:[%s236] sm:$0xff] %v1203
        %1206 = vst [vmem:[%s236 + $0x8] sm:$0xff] %v1204
        %s1207 = sand.u32 %s121, 1
        %s1208 = scalar_lea.sflag [#allocation4], %s1207
        %s1209 = sand.u32 %s121, 1
        %s1210 = smul.addr %s1209, 16
        %s1211 = scalar_lea.vmem [#allocation7], %s1210
        // Predicated region
        $region41: #{tpu_custom_call.1} parent=31 // pred_check
          %p1212 = pneg %p131
        $region42: #{tpu_custom_call.1} parent=31 // pred_check_branch
          %1214 = sbr.rel (%p1212) target = $region44
        $region43: #{tpu_custom_call.1} parent=31 // pred_region
          %s1215 = smul.u32 2, %s25
          %s1217 = ssub.s32 256, 256
          %1218 = vsyncadd %s1208, %s1217
          %s1219 = smul.addr %s1215, 2
          %s1220 = sadd.s32 %s26, %s1219
          %s1221 = smul.addr %s1220, 128
          %s1222 = scalar_lea.hbm %s3, %s1221
          %s1223 = sshll.u32 %s1211, 4
          %s1224 = int_to_ptr.vmem [resolvable:$true] %s1223
          %1229 = dma.vmem_to_hbm [thread:$0]  %s1224, 256, %s1222, %s1208, 128, 256, 8
        $region44: #{tpu_custom_call.1} parent=31 // pred_fallthru
          _
      $region32: #{tpu_custom_call.1} parent=5 // pred_fallthru
        _
      %p1230 = scmp.le.s32.totalorder 2, %s16
      // Predicated region
      $region45: #{tpu_custom_call.1} parent=5 // pred_check
        %p1231 = pneg %p1230
      $region46: #{tpu_custom_call.1} parent=5 // pred_check_branch
        %1233 = sbr.rel (%p1231) target = $region48
      $region47: #{tpu_custom_call.1} parent=5 // pred_region
        %s1234 = ssub.s32 %s16, 2
        // Predicated region
        $region49: #{tpu_custom_call.1} parent=47 // pred_check
          %p1235 = pneg %p137
        $region50: #{tpu_custom_call.1} parent=47 // pred_check_branch
          %1237 = sbr.rel (%p1235) target = $region52
        $region51: #{tpu_custom_call.1} parent=47 // pred_region
          %s1238 = sand.u32 %s122, 1
          %s1239 = scalar_lea.sflag [#allocation4], %s1238
          %s1240 = sand.u32 %s122, 1
          %s1241 = smul.addr %s1240, 16
          %s1242 = scalar_lea.vmem [#allocation7], %s1241
          %1243 = dma.done %s1239, 256
        $region52: #{tpu_custom_call.1} parent=47 // pred_fallthru
          _
      $region48: #{tpu_custom_call.1} parent=5 // pred_fallthru
        _
    $region6: #{tpu_custom_call.1} parent=1 // loop_footer
      %s20 = sadd.s32 1, %s16
    $region7: #{tpu_custom_call.1} parent=1 // loop_footer_branch
      %15 = sbr.rel target = $region3
    $region8: #{tpu_custom_call.1} parent=1 // loop_exit
      _
    %1244 = vsyncpa [#allocation3], 1
    %s1245 = scalar_lea.sflag [#allocation3], 1
    %1246 = vsyncpa %s1245, 1
    %1247 = vsyncpa [#allocation6], 1
    %s1248 = scalar_lea.sflag [#allocation6], 1
    %1249 = vsyncpa %s1248, 1
    %1250 = vsyncpa [#allocation4], 1
    %s1251 = scalar_lea.sflag [#allocation4], 1
    %1252 = vsyncpa %s1251, 1

</llo_original>
